<compile_context>
chip_gen: v6e
topology: v6e:2x2x1
jax: 0.10.0
libtpu: 0.0.40
codegen_flags: <defaults>
</compile_context>

<pallas_src>
import functools
import math

import jax
import jax.numpy as jnp
from jax import lax
from jax.experimental import pallas as pl
from jax.experimental.pallas import tpu as pltpu

DTYPE = jnp.bfloat16
VMEM_LIMIT = 64 * 1024 * 1024   # raised scoped-VMEM ceiling (v6e feedback); usage here is tiny.


# ----------------------------------------------------------------------------
# config (mirrors the LlamaConfig fields used by the module)
# ----------------------------------------------------------------------------
class Config:
    hidden_size = 256
    num_heads = 4
    num_kv_heads = 2
    head_dim = 64            # hidden_size // num_heads
    intermediate_size = 512
    rms_norm_eps = 1e-5


# ----------------------------------------------------------------------------
# helper: rotate-half within each head segment of a head-concatenated tensor
#   x: (rows, n_heads*head_dim) f32
#   r[:, j] = -x[:, j+half]  if (j % head_dim) <  half
#           =  x[:, j-half]  if (j % head_dim) >= half
# Two XLU rolls + sign select (no lane concatenation, no reshapes).
# ----------------------------------------------------------------------------
def _rotate_half_heads(x, head_dim):
    half = head_dim // 2
    n = x.shape[-1]
    left = pltpu.roll(x, n - half, 1)    # left[:, j]  = x[:, (j+half) % n]
    right = pltpu.roll(x, half, 1)       # right[:, j] = x[:, (j-half) % n]
    lane = lax.broadcasted_iota(jnp.int32, x.shape, 1)
    return jnp.where((lane % head_dim) < half, -left, right)


# ----------------------------------------------------------------------------
# kernel 1: fused skip_rmsnorm (attention norm) + QKV projection + RoPE
#   grid = (M // tm,)  — token-tiled over M = B*S (MXU row occupancy).
# outputs:
#   q_slab  (M, hq*d)        lane-dense, token-major (feeds attention / o_proj layout)
#   k_att   (hkv, M, d)      per-kv-head (attention K)
#   v_att   (hkv, M, d)      per-kv-head (attention V)
#   kv_rows (M, 2*hkv*d)     lane-dense rows for the KV-cache scatter (k heads then v heads)
#   res_out (M, H)           new residual (x [+ residual])
# ----------------------------------------------------------------------------
def _norm_qkv_rope_kernel(eps, d, hq, hkv, has_res, *refs):
    if has_res:
        (x_ref, res_ref, nw_ref, w_ref, cos_ref, sin_ref,
         q_out, k_out, v_out, kv_out, res_out) = refs
    else:
        (x_ref, nw_ref, w_ref, cos_ref, sin_ref,
         q_out, k_out, v_out, kv_out, res_out) = refs
        res_ref = None

    x = x_ref[...].astype(jnp.float32)                      # (tm, H)
    h = (x + res_ref[...].astype(jnp.float32)) if has_res else x

    # RMSNorm
    var = jnp.mean(h * h, axis=-1, keepdims=True)
    xn = h * lax.rsqrt(var + eps) * nw_ref[...].astype(jnp.float32)

    # fused QKV projection (single MXU matmul, bf16 inputs, f32 accumulate)
    qkv = jnp.dot(xn.astype(w_ref.dtype), w_ref[...],
                  preferred_element_type=jnp.float32)       # (tm, (hq+2*hkv)*d)

    qd, kd = hq * d, hkv * d
    q = qkv[:, :qd]                                         # 128-aligned slices
    k = qkv[:, qd:qd + kd]
    v = qkv[:, qd + kd:]

    # RoPE: cos/sin arrive as (tm, d); broadcast across heads in-register.
    cos = cos_ref[...].astype(jnp.float32)
    sin = sin_ref[...].astype(jnp.float32)
    cos_q = jnp.concatenate([cos] * hq, axis=1)
    sin_q = jnp.concatenate([sin] * hq, axis=1)
    cos_k = jnp.concatenate([cos] * hkv, axis=1)
    sin_k = jnp.concatenate([sin] * hkv, axis=1)

    q_rope = q * cos_q + _rotate_half_heads(q, d) * sin_q
    k_rope = k * cos_k + _rotate_half_heads(k, d) * sin_k

    # lane-dense stores
    res_out[...] = h.astype(res_out.dtype)
    q_out[...] = q_rope.astype(q_out.dtype)                 # (tm, hq*d) single slab
    kv_out[:, :kd] = k_rope.astype(kv_out.dtype)            # 128-aligned halves
    kv_out[:, kd:] = v.astype(kv_out.dtype)
    # per-kv-head K/V for the attention kernel (last dim = full d)
    for kh in range(hkv):
        k_out[kh] = k_rope[:, kh * d:(kh + 1) * d].astype(k_out.dtype)
        v_out[kh] = v[:, kh * d:(kh + 1) * d].astype(v_out.dtype)


def fused_norm_qkv_rope(x2, res2, norm_w, w_qkv_t, cos_tok, sin_tok, cfg, *, tm_max=256):
    M, H = x2.shape
    hq, hkv, d = cfg.num_heads, cfg.num_kv_heads, cfg.head_dim
    qkv_dim = (hq + 2 * hkv) * d
    tm = min(M, tm_max)
    assert M % tm == 0 and tm % 8 == 0, f"M={M} must tile by {tm} (multiple of 8)"
    has_res = res2 is not None

    kernel = functools.partial(_norm_qkv_rope_kernel, cfg.rms_norm_eps, d, hq, hkv, has_res)

    in_specs = [pl.BlockSpec((tm, H), lambda i: (i, 0))]
    inputs = [x2]
    if has_res:
        in_specs.append(pl.BlockSpec((tm, H), lambda i: (i, 0)))
        inputs.append(res2)
    in_specs += [
        pl.BlockSpec((1, H), lambda i: (0, 0)),
        pl.BlockSpec((H, qkv_dim), lambda i: (0, 0)),
        pl.BlockSpec((tm, d), lambda i: (i, 0)),
        pl.BlockSpec((tm, d), lambda i: (i, 0)),
    ]
    inputs += [norm_w.reshape(1, H), w_qkv_t, cos_tok, sin_tok]

    out_shape = (
        jax.ShapeDtypeStruct((M, hq * d), x2.dtype),
        jax.ShapeDtypeStruct((hkv, M, d), x2.dtype),
        jax.ShapeDtypeStruct((hkv, M, d), x2.dtype),
        jax.ShapeDtypeStruct((M, 2 * hkv * d), x2.dtype),
        jax.ShapeDtypeStruct((M, H), x2.dtype),
    )
    out_specs = (
        pl.BlockSpec((tm, hq * d), lambda i: (i, 0)),
        pl.BlockSpec((hkv, tm, d), lambda i: (0, i, 0)),
        pl.BlockSpec((hkv, tm, d), lambda i: (0, i, 0)),
        pl.BlockSpec((tm, 2 * hkv * d), lambda i: (i, 0)),
        pl.BlockSpec((tm, H), lambda i: (i, 0)),
    )
    # TODO(synk): at real model dims (H>=4096) tile the output-column axis of
    #             w_qkv_t with its own grid dim instead of keeping it whole (v7x VMEM).
    return pl.pallas_call(
        kernel, out_shape=out_shape, grid=(M // tm,),
        in_specs=in_specs, out_specs=out_specs,
        compiler_params=pltpu.CompilerParams(
            dimension_semantics=("parallel",),
            vmem_limit_bytes=VMEM_LIMIT),
    )(*inputs)


# ----------------------------------------------------------------------------
# kernel 2: GQA causal attention
#   grid = (B, Hkv); per step one GQA group; K/V DMA'd once per group.
#   Output is written straight into (B*S, hidden) token-major layout.
#   Requires group*head_dim % 128 == 0 for the q / output block lane width.
# ----------------------------------------------------------------------------
def _gqa_attn_kernel(scale, group, d, q_ref, k_ref, v_ref, o_ref):
    k = k_ref[0].astype(jnp.float32)                         # (S, d)
    v = v_ref[0].astype(jnp.float32)
    S = k.shape[0]
    # causal mask hoisted out of the per-group loop
    row = lax.broadcasted_iota(jnp.int32, (S, S), 0)
    col = lax.broadcasted_iota(jnp.int32, (S, S), 1)
    causal = col <= row
    # TODO(synk): for long prefill, restructure as online-softmax flash with a KV-tile
    #             "arbitrary" grid axis + m/l/acc scratch (v7x VMEM), and merge the group
    #             matmuls into one (group*S, d) matmul (needs a lane->sublane reshape).
    for g in range(group):
        q = q_ref[:, g * d:(g + 1) * d].astype(jnp.float32)  # (S, d)
        s = lax.dot_general(q, k, (((1,), (1,)), ((), ())),
                            preferred_element_type=jnp.float32) * scale
        s = jnp.where(causal, s, -1e30)
        m = jnp.max(s, axis=-1, keepdims=True)
        p = jnp.exp(s - m)
        l = jnp.sum(p, axis=-1, keepdims=True)
        o = jnp.dot(p, v, preferred_element_type=jnp.float32) / l
        o_ref[:, g * d:(g + 1) * d] = o.astype(o_ref.dtype)


def gqa_causal_attention(q_slab, k_att, v_att, B, S, scale):
    # q_slab: (B*S, hq*d) token-major; k/v: (hkv, B*S, d)  ->  (B*S, hq*d)
    M, qdim = q_slab.shape
    hkv, _, d = k_att.shape
    hq = qdim // d
    group = hq // hkv
    gd = group * d
    return pl.pallas_call(
        functools.partial(_gqa_attn_kernel, scale, group, d),
        out_shape=jax.ShapeDtypeStruct((M, qdim), q_slab.dtype),
        grid=(B, hkv),
        in_specs=[pl.BlockSpec((S, gd), lambda b, kh: (b, kh)),
                  pl.BlockSpec((1, S, d), lambda b, kh: (kh, b, 0)),
                  pl.BlockSpec((1, S, d), lambda b, kh: (kh, b, 0))],
        out_specs=pl.BlockSpec((S, gd), lambda b, kh: (b, kh)),
        compiler_params=pltpu.CompilerParams(
            dimension_semantics=("parallel", "parallel")),
    )(q_slab, k_att, v_att)


# ----------------------------------------------------------------------------
# kernel 3: fused o_proj + skip_rmsnorm (ffn norm) + SwiGLU MLP
#   One launch over (tm, H) token tiles; weights stay VMEM-resident.
# ----------------------------------------------------------------------------
def _oproj_norm_mlp_kernel(eps, attn_ref, wo_ref, res_ref, nw_ref,
                           wg_ref, wu_ref, wd_ref, out_ref, res_out_ref):
    y = jnp.dot(attn_ref[...], wo_ref[...], preferred_element_type=jnp.float32)
    h = y + res_ref[...].astype(jnp.float32)
    var = jnp.mean(h * h, axis=-1, keepdims=True)
    xn = h * lax.rsqrt(var + eps) * nw_ref[...].astype(jnp.float32)
    res_out_ref[...] = h.astype(res_out_ref.dtype)

    xb = xn.astype(wg_ref.dtype)
    g = jnp.dot(xb, wg_ref[...], preferred_element_type=jnp.float32)
    u = jnp.dot(xb, wu_ref[...], preferred_element_type=jnp.float32)
    act = (g * jax.nn.sigmoid(g) * u).astype(wd_ref.dtype)
    out_ref[...] = jnp.dot(act, wd_ref[...],
                           preferred_element_type=jnp.float32).astype(out_ref.dtype)


def fused_oproj_norm_mlp(attn, w_o_t, residual, norm_w,
                         w_gate_t, w_up_t, w_down_t, eps, *, tm_max=512):
    M, H = residual.shape
    Hq = attn.shape[1]
    I = w_gate_t.shape[1]
    tm = min(M, tm_max)
    assert M % tm == 0 and tm % 8 == 0, f"M={M} must tile by {tm} (multiple of 8)"
    # TODO(synk): at real model dims add an intermediate/output-column grid axis for the
    #             gate/up/down and o_proj weights (v7x 64 MiB VMEM) instead of whole blocks.
    return pl.pallas_call(
        functools.partial(_oproj_norm_mlp_kernel, eps),
        out_shape=(jax.ShapeDtypeStruct((M, H), attn.dtype),
                   jax.ShapeDtypeStruct((M, H), attn.dtype)),
        grid=(M // tm,),
        in_specs=[pl.BlockSpec((tm, Hq), lambda i: (i, 0)),
                  pl.BlockSpec((Hq, H), lambda i: (0, 0)),
                  pl.BlockSpec((tm, H), lambda i: (i, 0)),
                  pl.BlockSpec((1, H), lambda i: (0, 0)),
                  pl.BlockSpec((H, I), lambda i: (0, 0)),
                  pl.BlockSpec((H, I), lambda i: (0, 0)),
                  pl.BlockSpec((I, H), lambda i: (0, 0))],
        out_specs=(pl.BlockSpec((tm, H), lambda i: (i, 0)),
                   pl.BlockSpec((tm, H), lambda i: (i, 0))),
        compiler_params=pltpu.CompilerParams(
            dimension_semantics=("parallel",),
            vmem_limit_bytes=VMEM_LIMIT),
    )(attn, w_o_t, residual, norm_w.reshape(1, H), w_gate_t, w_up_t, w_down_t)


# ----------------------------------------------------------------------------
# kernel 4: in-place KV-cache scatter (update_kv_buffer)
#   kv_buffer is aliased in/out; only the B*S new rows are DMA'd (no full-cache copy).
# ----------------------------------------------------------------------------
def _kv_scatter_kernel(rows_ref, idx_ref, kv_in_ref, kv_out_ref, sems):
    del kv_in_ref  # aliased with kv_out_ref; untouched rows keep old contents
    n = rows_ref.shape[0]
    copies = []
    for r in range(n):
        cp = pltpu.make_async_copy(rows_ref.at[r], kv_out_ref.at[idx_ref[r]], sems.at[r])
        cp.start()
        copies.append(cp)
    for cp in copies:
        cp.wait()


def kv_cache_scatter(kv_rows, cur_select_index, kv_buffer):
    n = kv_rows.shape[0]
    return pl.pallas_call(
        _kv_scatter_kernel,
        out_shape=jax.ShapeDtypeStruct(kv_buffer.shape, kv_buffer.dtype),
        in_specs=[pl.BlockSpec(memory_space=pltpu.MemorySpace.VMEM),
                  pl.BlockSpec(memory_space=pltpu.MemorySpace.SMEM),
                  pl.BlockSpec(memory_space=pl.ANY)],
        out_specs=pl.BlockSpec(memory_space=pl.ANY),
        scratch_shapes=[pltpu.SemaphoreType.DMA((n,))],
        input_output_aliases={2: 0},
    )(kv_rows, cur_select_index, kv_buffer)


# ----------------------------------------------------------------------------
# parameters (torch-layout randoms, pre-transposed / pre-concatenated ONCE)
# ----------------------------------------------------------------------------
def init_params(key, cfg):
    ks = jax.random.split(key, 6)
    hs = cfg.hidden_size
    kvd = cfg.num_kv_heads * cfg.head_dim
    scale = 0.02
    q_w = (jax.random.normal(ks[0], (hs, hs)) * scale).astype(DTYPE)                       # (N, K)
    kv_w = (jax.random.normal(ks[1], (2 * kvd, hs)) * scale).astype(DTYPE)                 # (2*kvd, K)
    o_w = (jax.random.normal(ks[2], (hs, hs)) * scale).astype(DTYPE)
    gate_w = (jax.random.normal(ks[3], (cfg.intermediate_size, hs)) * scale).astype(DTYPE)
    up_w = (jax.random.normal(ks[4], (cfg.intermediate_size, hs)) * scale).astype(DTYPE)
    down_w = (jax.random.normal(ks[5], (hs, cfg.intermediate_size)) * scale).astype(DTYPE)
    return dict(
        attention_norm_weight=jnp.ones((hs,), jnp.float32),
        ffn_norm_weight=jnp.ones((hs,), jnp.float32),
        # fused + transposed once at init: columns are [q | k | v]
        w_qkv_t=jnp.concatenate([q_w, kv_w], axis=0).T,     # (hs, hs + 2*kvd)
        w_o_t=o_w.T,                                        # (hs, hs)
        w_gate_t=gate_w.T,                                  # (hs, inter)
        w_up_t=up_w.T,                                      # (hs, inter)
        w_down_t=down_w.T,                                  # (inter, hs)
    )


def build_rope(S, d, base=10000.0):
    """cos/sin per position, shape (S, head_dim) — no per-head pre-tiling."""
    inv_freq = 1.0 / (base ** (jnp.arange(0, d, 2, dtype=jnp.float32) / d))
    t = jnp.arange(S, dtype=jnp.float32)
    freqs = jnp.outer(t, inv_freq)                          # (S, d/2)
    emb = jnp.concatenate([freqs, freqs], axis=-1)          # (S, d)
    return jnp.cos(emb), jnp.sin(emb)


# ----------------------------------------------------------------------------
# LlamaDecoderLayer.forward  (context_forward path, seq_len > 1)
# ----------------------------------------------------------------------------
def decoder_layer_forward(params, cfg, hidden_states, residual, cos, sin,
                          kv_buffer, cur_select_index, qk_scale=None):
    B, S, H = hidden_states.shape
    d, hq, hkv = cfg.head_dim, cfg.num_heads, cfg.num_kv_heads
    M = B * S
    if qk_scale is None:
        qk_scale = 1.0 / math.sqrt(d)

    # flatten (B, S) -> token-major M (free metadata reshapes)
    x2 = hidden_states.reshape(M, H)
    res2 = residual.reshape(M, H) if residual is not None else None
    cos_tok = jnp.tile(cos, (B, 1))                          # (M, d), positions 0..S-1 per seq
    sin_tok = jnp.tile(sin, (B, 1))
    # TODO(synk): with a non-empty cache (start position > 0) cos/sin need per-sequence
    #             position offsets and attention must also read the cached K/V.

    # 1. skip_rmsnorm (attention norm) + QKV projection + RoPE  (token-tiled)
    q_slab, k_att, v_att, kv_rows, resid = fused_norm_qkv_rope(
        x2, res2, params["attention_norm_weight"], params["w_qkv_t"],
        cos_tok, sin_tok, cfg)

    # KV-cache update: in-place Pallas scatter (writes only B*S rows).
    kv_buffer = kv_cache_scatter(
        kv_rows.reshape(M, 2 * hkv, d), cur_select_index, kv_buffer)

    # 2. causal GQA attention  ->  (B*S, hidden), token-major
    attn = gqa_causal_attention(q_slab, k_att, v_att, B, S, qk_scale)

    # 3+4. o_proj + skip_rmsnorm (ffn norm) + SwiGLU MLP  (single fused kernel)
    out, resid2 = fused_oproj_norm_mlp(
        attn, params["w_o_t"], resid, params["ffn_norm_weight"],
        params["w_gate_t"], params["w_up_t"], params["w_down_t"], cfg.rms_norm_eps)

    return out.reshape(B, S, H), resid2.reshape(B, S, H), kv_buffer


# ----------------------------------------------------------------------------
if __name__ == "__main__":
    cfg = Config()
    key = jax.random.PRNGKey(0)
    pkey, xkey = jax.random.split(key)
    params = init_params(pkey, cfg)

    B, S = 2, 8
    hidden_states = (jax.random.normal(xkey, (B, S, cfg.hidden_size)) * 0.1).astype(DTYPE)
    residual = None                                    # first layer: residual is None
    cos, sin = build_rope(S, cfg.head_dim)
    kv_buffer = jnp.zeros((64, 2 * cfg.num_kv_heads, cfg.head_dim), DTYPE)
    cur_select_index = jnp.arange(B * S, dtype=jnp.int32)

    out, new_residual, kv_buffer = decoder_layer_forward(
        params, cfg, hidden_states, residual, cos, sin,
        kv_buffer, cur_select_index, qk_scale=1.0 / math.sqrt(cfg.head_dim))

    # run a second "layer" reusing the residual path (exercises has_residual=True)
    out2, new_residual2, kv_buffer = decoder_layer_forward(
        params, cfg, out, new_residual, cos, sin,
        kv_buffer, cur_select_index, qk_scale=1.0 / math.sqrt(cfg.head_dim))

    jax.block_until_ready((out, new_residual, out2, new_residual2, kv_buffer))
    assert out.shape == (B, S, cfg.hidden_size)
    assert new_residual.shape == (B, S, cfg.hidden_size)
    assert out2.shape == (B, S, cfg.hidden_size)
    assert kv_buffer.shape == (64, 2 * cfg.num_kv_heads, cfg.head_dim)
    # the in-place scatter must have written the first B*S cache rows
    assert bool(jnp.any(kv_buffer[:B * S] != 0))
    print("KERNEL_OK")
</pallas_src>

<mosaic_0001>
module attributes {stable_mosaic.version = 11 : i64} {
  func.func @_norm_qkv_rope_kernel(%arg0: i32, %arg1: memref<16x256xbf16, #tpu.memory_space<vmem>>, %arg2: memref<1x256xf32, #tpu.memory_space<vmem>>, %arg3: memref<256x512xbf16, #tpu.memory_space<vmem>>, %arg4: memref<16x64xf32, #tpu.memory_space<vmem>>, %arg5: memref<16x64xf32, #tpu.memory_space<vmem>>, %arg6: memref<16x256xbf16, #tpu.memory_space<vmem>>, %arg7: memref<2x16x64xbf16, #tpu.memory_space<vmem>>, %arg8: memref<2x16x64xbf16, #tpu.memory_space<vmem>>, %arg9: memref<16x256xbf16, #tpu.memory_space<vmem>>, %arg10: memref<16x256xbf16, #tpu.memory_space<vmem>>) attributes {dimension_semantics = [#tpu.dimension_semantics<parallel>], iteration_bounds = array<i64: 1>, scalar_prefetch = 0 : i64, scratch_operands = 0 : i64, tpu.core_type = #tpu.core_type<tc>, window_params = [{transform_indices = @transform_0, window_bounds = array<i64: 16, 256>}, {pipeline_mode = #tpu.pipeline_mode<synchronous>, transform_indices = @transform_1, window_bounds = array<i64: 1, 256>}, {pipeline_mode = #tpu.pipeline_mode<synchronous>, transform_indices = @transform_2, window_bounds = array<i64: 256, 512>}, {transform_indices = @transform_3, window_bounds = array<i64: 16, 64>}, {transform_indices = @transform_4, window_bounds = array<i64: 16, 64>}, {transform_indices = @transform_5, window_bounds = array<i64: 16, 256>}, {transform_indices = @transform_6, window_bounds = array<i64: 2, 16, 64>}, {transform_indices = @transform_7, window_bounds = array<i64: 2, 16, 64>}, {transform_indices = @transform_8, window_bounds = array<i64: 16, 256>}, {transform_indices = @transform_9, window_bounds = array<i64: 16, 256>}]} {
    %c0 = arith.constant 0 : index
    %c0_0 = arith.constant 0 : index
    %0 = vector.load %arg1[%c0, %c0_0] : memref<16x256xbf16, #tpu.memory_space<vmem>>, vector<16x256xbf16>
    %1 = arith.extf %0 : vector<16x256xbf16> to vector<16x256xf32>
    %2 = arith.mulf %1, %1 : vector<16x256xf32>
    %cst = arith.constant dense<0.000000e+00> : vector<16xf32>
    %3 = vector.multi_reduction <add>, %2, %cst [1] : vector<16x256xf32> to vector<16xf32>
    %4 = vector.shape_cast %3 : vector<16xf32> to vector<16x1xf32>
    %cst_1 = arith.constant 2.560000e+02 : f32
    %5 = vector.broadcast %cst_1 : f32 to vector<16x1xf32>
    %6 = arith.divf %4, %5 : vector<16x1xf32>
    %cst_2 = arith.constant 9.99999974E-6 : f32
    %7 = vector.broadcast %cst_2 : f32 to vector<16x1xf32>
    %8 = arith.addf %6, %7 : vector<16x1xf32>
    %9 = math.rsqrt %8 : vector<16x1xf32>
    %10 = vector.broadcast %9 : vector<16x1xf32> to vector<16x256xf32>
    %11 = arith.mulf %1, %10 : vector<16x256xf32>
    %c0_3 = arith.constant 0 : index
    %c0_4 = arith.constant 0 : index
    %12 = vector.load %arg2[%c0_3, %c0_4] : memref<1x256xf32, #tpu.memory_space<vmem>>, vector<1x256xf32>
    %13 = vector.broadcast %12 : vector<1x256xf32> to vector<16x256xf32>
    %14 = arith.mulf %11, %13 : vector<16x256xf32>
    %15 = arith.truncf %14 : vector<16x256xf32> to vector<16x256xbf16>
    %c0_5 = arith.constant 0 : index
    %c0_6 = arith.constant 0 : index
    %16 = vector.load %arg3[%c0_5, %c0_6] : memref<256x512xbf16, #tpu.memory_space<vmem>>, vector<256x512xbf16>
    %cst_7 = arith.constant dense<0.000000e+00> : vector<16x512xf32>
    %17 = tpu.matmul %15, %16, %cst_7 {dimension_numbers = #tpu.dot_dimension_numbers<[1], [0], [0], [1], [0, 0, 1, 1], [], []>} : vector<16x256xbf16>, vector<256x512xbf16>, vector<16x512xf32> -> vector<16x512xf32>
    %18 = vector.extract_strided_slice %17 {offsets = [0, 0], sizes = [16, 256], strides = [1, 1]} : vector<16x512xf32> to vector<16x256xf32>
    %19 = vector.extract_strided_slice %17 {offsets = [0, 256], sizes = [16, 128], strides = [1, 1]} : vector<16x512xf32> to vector<16x128xf32>
    %20 = vector.extract_strided_slice %17 {offsets = [0, 384], sizes = [16, 128], strides = [1, 1]} : vector<16x512xf32> to vector<16x128xf32>
    %c0_8 = arith.constant 0 : index
    %c0_9 = arith.constant 0 : index
    %21 = vector.load %arg4[%c0_8, %c0_9] : memref<16x64xf32, #tpu.memory_space<vmem>>, vector<16x64xf32>
    %c0_10 = arith.constant 0 : index
    %c0_11 = arith.constant 0 : index
    %22 = vector.load %arg5[%c0_10, %c0_11] : memref<16x64xf32, #tpu.memory_space<vmem>>, vector<16x64xf32>
    %23 = tpu.concatenate %21, %21, %21, %21 in 1 : vector<16x64xf32>, vector<16x64xf32>, vector<16x64xf32>, vector<16x64xf32> -> vector<16x256xf32>
    %24 = tpu.concatenate %22, %22, %22, %22 in 1 : vector<16x64xf32>, vector<16x64xf32>, vector<16x64xf32>, vector<16x64xf32> -> vector<16x256xf32>
    %25 = tpu.concatenate %21, %21 in 1 : vector<16x64xf32>, vector<16x64xf32> -> vector<16x128xf32>
    %26 = tpu.concatenate %22, %22 in 1 : vector<16x64xf32>, vector<16x64xf32> -> vector<16x128xf32>
    %27 = arith.mulf %18, %23 : vector<16x256xf32>
    %c224_i32 = arith.constant 224 : i32
    %28 = tpu.dynamic_rotate %18 by %c224_i32 dim 1 : vector<16x256xf32>, i32 -> vector<16x256xf32>
    %c32_i32 = arith.constant 32 : i32
    %29 = tpu.dynamic_rotate %18 by %c32_i32 dim 1 : vector<16x256xf32>, i32 -> vector<16x256xf32>
    %30 = tpu.iota {dimensions = array<i32: 1>} : vector<16x256xi32>
    %c64_i32 = arith.constant 64 : i32
    %c0_i32 = arith.constant 0 : i32
    %31 = arith.cmpi eq, %c64_i32, %c0_i32 : i32
    %c1_i32 = arith.constant 1 : i32
    %32 = arith.select %31, %c1_i32, %c64_i32 : i32
    %33 = vector.broadcast %32 : i32 to vector<16x256xi32>
    %34 = arith.remsi %30, %33 : vector<16x256xi32>
    %c0_i32_12 = arith.constant 0 : i32
    %35 = vector.broadcast %c0_i32_12 : i32 to vector<16x256xi32>
    %36 = arith.cmpi ne, %34, %35 : vector<16x256xi32>
    %c0_i32_13 = arith.constant 0 : i32
    %37 = vector.broadcast %c0_i32_13 : i32 to vector<16x256xi32>
    %38 = arith.cmpi slt, %34, %37 : vector<16x256xi32>
    %c0_i32_14 = arith.constant 0 : i32
    %39 = arith.cmpi slt, %32, %c0_i32_14 : i32
    %40 = vector.broadcast %39 : i1 to vector<16x256xi1>
    %41 = vector.broadcast %40 : vector<16x256xi1> to vector<16x256xi1>
    %42 = arith.xori %38, %41 : vector<16x256xi1>
    %43 = arith.andi %42, %36 : vector<16x256xi1>
    %44 = vector.broadcast %32 : i32 to vector<16x256xi32>
    %45 = arith.addi %34, %44 : vector<16x256xi32>
    %46 = arith.select %43, %45, %34 : vector<16x256xi1>, vector<16x256xi32>
    %c32_i32_15 = arith.constant 32 : i32
    %47 = vector.broadcast %c32_i32_15 : i32 to vector<16x256xi32>
    %48 = arith.cmpi slt, %46, %47 : vector<16x256xi32>
    %cst_16 = arith.constant 0.000000e+00 : f32
    %49 = vector.broadcast %cst_16 : f32 to vector<16x256xf32>
    %50 = arith.subf %49, %28 : vector<16x256xf32>
    %51 = arith.select %48, %50, %29 : vector<16x256xi1>, vector<16x256xf32>
    %52 = arith.mulf %51, %24 : vector<16x256xf32>
    %53 = arith.addf %27, %52 : vector<16x256xf32>
    %54 = arith.mulf %19, %25 : vector<16x128xf32>
    %c96_i32 = arith.constant 96 : i32
    %55 = tpu.dynamic_rotate %19 by %c96_i32 dim 1 : vector<16x128xf32>, i32 -> vector<16x128xf32>
    %c32_i32_17 = arith.constant 32 : i32
    %56 = tpu.dynamic_rotate %19 by %c32_i32_17 dim 1 : vector<16x128xf32>, i32 -> vector<16x128xf32>
    %57 = tpu.iota {dimensions = array<i32: 1>} : vector<16x128xi32>
    %c64_i32_18 = arith.constant 64 : i32
    %c0_i32_19 = arith.constant 0 : i32
    %58 = arith.cmpi eq, %c64_i32_18, %c0_i32_19 : i32
    %c1_i32_20 = arith.constant 1 : i32
    %59 = arith.select %58, %c1_i32_20, %c64_i32_18 : i32
    %60 = vector.broadcast %59 : i32 to vector<16x128xi32>
    %61 = arith.remsi %57, %60 : vector<16x128xi32>
    %c0_i32_21 = arith.constant 0 : i32
    %62 = vector.broadcast %c0_i32_21 : i32 to vector<16x128xi32>
    %63 = arith.cmpi ne, %61, %62 : vector<16x128xi32>
    %c0_i32_22 = arith.constant 0 : i32
    %64 = vector.broadcast %c0_i32_22 : i32 to vector<16x128xi32>
    %65 = arith.cmpi slt, %61, %64 : vector<16x128xi32>
    %c0_i32_23 = arith.constant 0 : i32
    %66 = arith.cmpi slt, %59, %c0_i32_23 : i32
    %67 = vector.broadcast %66 : i1 to vector<16x128xi1>
    %68 = vector.broadcast %67 : vector<16x128xi1> to vector<16x128xi1>
    %69 = arith.xori %65, %68 : vector<16x128xi1>
    %70 = arith.andi %69, %63 : vector<16x128xi1>
    %71 = vector.broadcast %59 : i32 to vector<16x128xi32>
    %72 = arith.addi %61, %71 : vector<16x128xi32>
    %73 = arith.select %70, %72, %61 : vector<16x128xi1>, vector<16x128xi32>
    %c32_i32_24 = arith.constant 32 : i32
    %74 = vector.broadcast %c32_i32_24 : i32 to vector<16x128xi32>
    %75 = arith.cmpi slt, %73, %74 : vector<16x128xi32>
    %cst_25 = arith.constant 0.000000e+00 : f32
    %76 = vector.broadcast %cst_25 : f32 to vector<16x128xf32>
    %77 = arith.subf %76, %55 : vector<16x128xf32>
    %78 = arith.select %75, %77, %56 : vector<16x128xi1>, vector<16x128xf32>
    %79 = arith.mulf %78, %26 : vector<16x128xf32>
    %80 = arith.addf %54, %79 : vector<16x128xf32>
    %81 = arith.truncf %1 : vector<16x256xf32> to vector<16x256xbf16>
    %c0_26 = arith.constant 0 : index
    %c0_27 = arith.constant 0 : index
    %82 = vector.load %arg10[%c0_26, %c0_27] : memref<16x256xbf16, #tpu.memory_space<vmem>>, vector<16x256xbf16>
    tpu.vector_store %arg10[%c0_26, %c0_27], %81 {strides = array<i32>} : memref<16x256xbf16, #tpu.memory_space<vmem>>, vector<16x256xbf16>,
    %83 = arith.truncf %53 : vector<16x256xf32> to vector<16x256xbf16>
    %c0_28 = arith.constant 0 : index
    %c0_29 = arith.constant 0 : index
    %84 = vector.load %arg6[%c0_28, %c0_29] : memref<16x256xbf16, #tpu.memory_space<vmem>>, vector<16x256xbf16>
    tpu.vector_store %arg6[%c0_28, %c0_29], %83 {strides = array<i32>} : memref<16x256xbf16, #tpu.memory_space<vmem>>, vector<16x256xbf16>,
    %85 = arith.truncf %80 : vector<16x128xf32> to vector<16x128xbf16>
    %c0_30 = arith.constant 0 : index
    %c0_31 = arith.constant 0 : index
    %86 = vector.load %arg9[%c0_30, %c0_31] : memref<16x256xbf16, #tpu.memory_space<vmem>>, vector<16x128xbf16>
    tpu.vector_store %arg9[%c0_30, %c0_31], %85 {strides = array<i32>} : memref<16x256xbf16, #tpu.memory_space<vmem>>, vector<16x128xbf16>,
    %87 = arith.truncf %20 : vector<16x128xf32> to vector<16x128xbf16>
    %c0_32 = arith.constant 0 : index
    %c128 = arith.constant 128 : index
    %88 = vector.load %arg9[%c0_32, %c128] : memref<16x256xbf16, #tpu.memory_space<vmem>>, vector<16x128xbf16>
    tpu.vector_store %arg9[%c0_32, %c128], %87 {strides = array<i32>} : memref<16x256xbf16, #tpu.memory_space<vmem>>, vector<16x128xbf16>,
    %89 = vector.extract_strided_slice %80 {offsets = [0, 0], sizes = [16, 64], strides = [1, 1]} : vector<16x128xf32> to vector<16x64xf32>
    %90 = arith.truncf %89 : vector<16x64xf32> to vector<16x64xbf16>
    %c0_33 = arith.constant 0 : index
    %c0_34 = arith.constant 0 : index
    %c0_35 = arith.constant 0 : index
    %91 = vector.load %arg7[%c0_33, %c0_34, %c0_35] : memref<2x16x64xbf16, #tpu.memory_space<vmem>>, vector<1x16x64xbf16>
    %92 = vector.shape_cast %91 : vector<1x16x64xbf16> to vector<16x64xbf16>
    %93 = vector.shape_cast %90 : vector<16x64xbf16> to vector<1x16x64xbf16>
    tpu.vector_store %arg7[%c0_33, %c0_34, %c0_35], %93 {strides = array<i32>} : memref<2x16x64xbf16, #tpu.memory_space<vmem>>, vector<1x16x64xbf16>,
    %94 = vector.extract_strided_slice %20 {offsets = [0, 0], sizes = [16, 64], strides = [1, 1]} : vector<16x128xf32> to vector<16x64xf32>
    %95 = arith.truncf %94 : vector<16x64xf32> to vector<16x64xbf16>
    %c0_36 = arith.constant 0 : index
    %c0_37 = arith.constant 0 : index
    %c0_38 = arith.constant 0 : index
    %96 = vector.load %arg8[%c0_36, %c0_37, %c0_38] : memref<2x16x64xbf16, #tpu.memory_space<vmem>>, vector<1x16x64xbf16>
    %97 = vector.shape_cast %96 : vector<1x16x64xbf16> to vector<16x64xbf16>
    %98 = vector.shape_cast %95 : vector<16x64xbf16> to vector<1x16x64xbf16>
    tpu.vector_store %arg8[%c0_36, %c0_37, %c0_38], %98 {strides = array<i32>} : memref<2x16x64xbf16, #tpu.memory_space<vmem>>, vector<1x16x64xbf16>,
    %99 = vector.extract_strided_slice %80 {offsets = [0, 64], sizes = [16, 64], strides = [1, 1]} : vector<16x128xf32> to vector<16x64xf32>
    %100 = arith.truncf %99 : vector<16x64xf32> to vector<16x64xbf16>
    %c1 = arith.constant 1 : index
    %c0_39 = arith.constant 0 : index
    %c0_40 = arith.constant 0 : index
    %101 = vector.load %arg7[%c1, %c0_39, %c0_40] : memref<2x16x64xbf16, #tpu.memory_space<vmem>>, vector<1x16x64xbf16>
    %102 = vector.shape_cast %101 : vector<1x16x64xbf16> to vector<16x64xbf16>
    %103 = vector.shape_cast %100 : vector<16x64xbf16> to vector<1x16x64xbf16>
    tpu.vector_store %arg7[%c1, %c0_39, %c0_40], %103 {strides = array<i32>} : memref<2x16x64xbf16, #tpu.memory_space<vmem>>, vector<1x16x64xbf16>,
    %104 = vector.extract_strided_slice %20 {offsets = [0, 64], sizes = [16, 64], strides = [1, 1]} : vector<16x128xf32> to vector<16x64xf32>
    %105 = arith.truncf %104 : vector<16x64xf32> to vector<16x64xbf16>
    %c1_41 = arith.constant 1 : index
    %c0_42 = arith.constant 0 : index
    %c0_43 = arith.constant 0 : index
    %106 = vector.load %arg8[%c1_41, %c0_42, %c0_43] : memref<2x16x64xbf16, #tpu.memory_space<vmem>>, vector<1x16x64xbf16>
    %107 = vector.shape_cast %106 : vector<1x16x64xbf16> to vector<16x64xbf16>
    %108 = vector.shape_cast %105 : vector<16x64xbf16> to vector<1x16x64xbf16>
    tpu.vector_store %arg8[%c1_41, %c0_42, %c0_43], %108 {strides = array<i32>} : memref<2x16x64xbf16, #tpu.memory_space<vmem>>, vector<1x16x64xbf16>,
    return
  }
  func.func @transform_0(%arg0: i32) -> (i32, i32) {
    %c0_i32 = arith.constant 0 : i32
    %c0_i32_0 = arith.constant 0 : i32
    return %arg0, %c0_i32 : i32, i32
  }
  func.func @transform_1(%arg0: i32) -> (i32, i32) {
    %c0_i32 = arith.constant 0 : i32
    %c0_i32_0 = arith.constant 0 : i32
    %c0_i32_1 = arith.constant 0 : i32
    return %c0_i32, %c0_i32_0 : i32, i32
  }
  func.func @transform_2(%arg0: i32) -> (i32, i32) {
    %c0_i32 = arith.constant 0 : i32
    %c0_i32_0 = arith.constant 0 : i32
    %c0_i32_1 = arith.constant 0 : i32
    return %c0_i32, %c0_i32_0 : i32, i32
  }
  func.func @transform_3(%arg0: i32) -> (i32, i32) {
    %c0_i32 = arith.constant 0 : i32
    %c0_i32_0 = arith.constant 0 : i32
    return %arg0, %c0_i32 : i32, i32
  }
  func.func @transform_4(%arg0: i32) -> (i32, i32) {
    %c0_i32 = arith.constant 0 : i32
    %c0_i32_0 = arith.constant 0 : i32
    return %arg0, %c0_i32 : i32, i32
  }
  func.func @transform_5(%arg0: i32) -> (i32, i32) {
    %c0_i32 = arith.constant 0 : i32
    %c0_i32_0 = arith.constant 0 : i32
    return %arg0, %c0_i32 : i32, i32
  }
  func.func @transform_6(%arg0: i32) -> (i32, i32, i32) {
    %c0_i32 = arith.constant 0 : i32
    %c0_i32_0 = arith.constant 0 : i32
    %c0_i32_1 = arith.constant 0 : i32
    return %c0_i32, %arg0, %c0_i32_0 : i32, i32, i32
  }
  func.func @transform_7(%arg0: i32) -> (i32, i32, i32) {
    %c0_i32 = arith.constant 0 : i32
    %c0_i32_0 = arith.constant 0 : i32
    %c0_i32_1 = arith.constant 0 : i32
    return %c0_i32, %arg0, %c0_i32_0 : i32, i32, i32
  }
  func.func @transform_8(%arg0: i32) -> (i32, i32) {
    %c0_i32 = arith.constant 0 : i32
    %c0_i32_0 = arith.constant 0 : i32
    return %arg0, %c0_i32 : i32, i32
  }
  func.func @transform_9(%arg0: i32) -> (i32, i32) {
    %c0_i32 = arith.constant 0 : i32
    %c0_i32_0 = arith.constant 0 : i32
    return %arg0, %c0_i32 : i32, i32
  }
}

</mosaic_0001>

<llo_original>
// kernel: tpu_custom_call.1
$region0: #{tpu_custom_call.1}
  #allocation0 [shape = 'u32[]', space=smem, size = 0x4, offset = 0x4, fixed_abs, tag = 'smem constant byte address 0x4 - core index']
  #allocation1 [shape = 'u32[144,128]{1,0:T(1,128)}', space=vmem, size = 0x12000, scoped, tag = 'internal scratch']
  %s0 = inlined_call_operand.hbm [shape: bf16[16,256], index: 0, kind: input, shape index: {}]
  %s1 = inlined_call_operand.hbm [shape: f32[1,256], index: 1, kind: input, shape index: {}]
  %s2 = inlined_call_operand.hbm [shape: bf16[256,512], index: 2, kind: input, shape index: {}]
  %s3 = inlined_call_operand.hbm [shape: f32[16,64], index: 3, kind: input, shape index: {}]
  %s4 = inlined_call_operand.hbm [shape: f32[16,64], index: 4, kind: input, shape index: {}]
  %s5 = inlined_call_operand.hbm [shape: bf16[16,256], index: 5, kind: output, shape index: {0}]
  %s6 = inlined_call_operand.hbm [shape: bf16[2,16,64], index: 6, kind: output, shape index: {1}]
  %s7 = inlined_call_operand.hbm [shape: bf16[2,16,64], index: 7, kind: output, shape index: {2}]
  %s8 = inlined_call_operand.hbm [shape: bf16[16,256], index: 8, kind: output, shape index: {3}]
  %s9 = inlined_call_operand.hbm [shape: bf16[16,256], index: 9, kind: output, shape index: {4}]
  %10 = xla_tuple %s5, %s6, %s7, %s8, %s9
  %s11 = sld [smem:[#allocation0]]
  $region82: #{tpu_custom_call.1} parent=0
    _
  %s13 = ssub.s32 1, %s11
  %s14 = scalar_select 0, %s13, %s11
  $region1: #{tpu_custom_call.1} parent=0
    #allocation2 [shape = 'u8[8192]{0}', space=vmem, size = 0x2000, scoped, tag = 'input window, operand 0, single buffered']
    #allocation3 [shape = 's32[1]{0}', space=sflag, size = 0x4, scoped, tag = 'scoped memory for tpu_custom_call.1']
    #allocation4 [shape = 's32[1]{0}', space=sflag, size = 0x4, scoped, tag = 'scoped memory for tpu_custom_call.1']
    #allocation5 [shape = 'u8[1024]{0}', space=vmem, size = 0x400, scoped, tag = 'input window, operand 1, single buffered']
    #allocation6 [shape = 's32[1]{0}', space=sflag, size = 0x4, scoped, tag = 'scoped memory for tpu_custom_call.1']
    #allocation7 [shape = 'u8[262144]{0}', space=vmem, size = 0x40000, scoped, tag = 'input window, operand 2, single buffered']
    #allocation8 [shape = 'u8[8192]{0}', space=vmem, size = 0x2000, scoped, tag = 'input window, operand 3, single buffered']
    #allocation9 [shape = 's32[1]{0}', space=sflag, size = 0x4, scoped, tag = 'scoped memory for tpu_custom_call.1']
    #allocation10 [shape = 'u8[8192]{0}', space=vmem, size = 0x2000, scoped, tag = 'input window, operand 4, single buffered']
    #allocation11 [shape = 'u8[8192]{0}', space=vmem, size = 0x2000, scoped, tag = 'output window, operand 0, single buffered']
    #allocation12 [shape = 'u8[8192]{0}', space=vmem, size = 0x2000, scoped, tag = 'output window, operand 1, single buffered']
    #allocation13 [shape = 's32[1]{0}', space=sflag, size = 0x4, scoped, tag = 'scoped memory for tpu_custom_call.1']
    #allocation14 [shape = 'u8[8192]{0}', space=vmem, size = 0x2000, scoped, tag = 'output window, operand 2, single buffered']
    #allocation15 [shape = 'u8[8192]{0}', space=vmem, size = 0x2000, scoped, tag = 'output window, operand 3, single buffered']
    #allocation16 [shape = 's32[1]{0}', space=sflag, size = 0x4, scoped, tag = 'scoped memory for tpu_custom_call.1']
    #allocation17 [shape = 'u8[8192]{0}', space=vmem, size = 0x2000, scoped, tag = 'output window, operand 4, single buffered']
    %15 = vsyncpa [#allocation3], 0
    %16 = vsyncpa [#allocation6], 0
    %17 = vsyncpa [#allocation9], 0
    %18 = vsyncpa [#allocation4], 0
    %19 = vsyncpa [#allocation13], 0
    %20 = vsyncpa [#allocation16], 0
    // Predicated region
    $region2: #{tpu_custom_call.1} parent=1 // pred_check
      _
    $region3: #{tpu_custom_call.1} parent=1 // pred_check_branch
      %22 = sbr.rel (0) target = $region5
    $region4: #{tpu_custom_call.1} parent=1 // pred_region
      %s24 = ssub.s32 256, 256
      %25 = vsyncadd [#allocation3], %s24
      %s26 = sshll.u32 [#allocation2], 4
      %s27 = int_to_ptr.vmem [resolvable:$true] %s26
      %32 = dma.hbm_to_vmem [thread:$0]  %s0, 256, %s27, [#allocation3], 128, 128, 8
    $region5: #{tpu_custom_call.1} parent=1 // pred_fallthru
      _
    // Predicated region
    $region6: #{tpu_custom_call.1} parent=1 // pred_check
      _
    $region7: #{tpu_custom_call.1} parent=1 // pred_check_branch
      %34 = sbr.rel (0) target = $region9
    $region8: #{tpu_custom_call.1} parent=1 // pred_region
      %s36 = ssub.s32 32, 32
      %37 = vsyncadd [#allocation6], %s36
      %s39 = sshll.u32 [#allocation5], 4
      %s40 = int_to_ptr.vmem [resolvable:$true] %s39
      %42 = dma.hbm_to_vmem [thread:$0]  %s1, 32, %s40, [#allocation6]
    $region9: #{tpu_custom_call.1} parent=1 // pred_fallthru
      _
    // Predicated region
    $region10: #{tpu_custom_call.1} parent=1 // pred_check
      _
    $region11: #{tpu_custom_call.1} parent=1 // pred_check_branch
      %44 = sbr.rel (0) target = $region13
    $region12: #{tpu_custom_call.1} parent=1 // pred_region
      %s46 = ssub.s32 8192, 8192
      %47 = vsyncadd [#allocation6], %s46
      %s48 = sshll.u32 [#allocation7], 4
      %s49 = int_to_ptr.vmem [resolvable:$true] %s48
      %54 = dma.hbm_to_vmem [thread:$0]  %s2, 8192, %s49, [#allocation6], 256, 256, 16
    $region13: #{tpu_custom_call.1} parent=1 // pred_fallthru
      _
    // Predicated region
    $region14: #{tpu_custom_call.1} parent=1 // pred_check
      _
    $region15: #{tpu_custom_call.1} parent=1 // pred_check_branch
      %56 = sbr.rel (0) target = $region17
    $region16: #{tpu_custom_call.1} parent=1 // pred_region
      %s58 = ssub.s32 256, 256
      %59 = vsyncadd [#allocation9], %s58
      %s60 = sshll.u32 [#allocation8], 4
      %s61 = int_to_ptr.vmem [resolvable:$true] %s60
      %66 = dma.hbm_to_vmem [thread:$0]  %s3, 256, %s61, [#allocation9], 128, 128, 8
    $region17: #{tpu_custom_call.1} parent=1 // pred_fallthru
      _
    // Predicated region
    $region18: #{tpu_custom_call.1} parent=1 // pred_check
      _
    $region19: #{tpu_custom_call.1} parent=1 // pred_check_branch
      %68 = sbr.rel (0) target = $region21
    $region20: #{tpu_custom_call.1} parent=1 // pred_region
      %s70 = ssub.s32 256, 256
      %71 = vsyncadd [#allocation9], %s70
      %s72 = sshll.u32 [#allocation10], 4
      %s73 = int_to_ptr.vmem [resolvable:$true] %s72
      %78 = dma.hbm_to_vmem [thread:$0]  %s4, 256, %s73, [#allocation9], 128, 128, 8
    $region21: #{tpu_custom_call.1} parent=1 // pred_fallthru
      _
    // Predicated region
    $region22: #{tpu_custom_call.1} parent=1 // pred_check
      _
    $region23: #{tpu_custom_call.1} parent=1 // pred_check_branch
      %80 = sbr.rel (0) target = $region25
    $region24: #{tpu_custom_call.1} parent=1 // pred_region
      %81 = dma.done [#allocation3], 256
    $region25: #{tpu_custom_call.1} parent=1 // pred_fallthru
      _
    // Predicated region
    $region26: #{tpu_custom_call.1} parent=1 // pred_check
      _
    $region27: #{tpu_custom_call.1} parent=1 // pred_check_branch
      %83 = sbr.rel (0) target = $region29
    $region28: #{tpu_custom_call.1} parent=1 // pred_region
      %84 = dma.done [#allocation6], 32
    $region29: #{tpu_custom_call.1} parent=1 // pred_fallthru
      _
    // Predicated region
    $region30: #{tpu_custom_call.1} parent=1 // pred_check
      _
    $region31: #{tpu_custom_call.1} parent=1 // pred_check_branch
      %86 = sbr.rel (0) target = $region33
    $region32: #{tpu_custom_call.1} parent=1 // pred_region
      %87 = dma.done [#allocation6], 8192
    $region33: #{tpu_custom_call.1} parent=1 // pred_fallthru
      _
    // Predicated region
    $region34: #{tpu_custom_call.1} parent=1 // pred_check
      _
    $region35: #{tpu_custom_call.1} parent=1 // pred_check_branch
      %89 = sbr.rel (0) target = $region37
    $region36: #{tpu_custom_call.1} parent=1 // pred_region
      %90 = dma.done [#allocation9], 256
    $region37: #{tpu_custom_call.1} parent=1 // pred_fallthru
      _
    // Predicated region
    $region38: #{tpu_custom_call.1} parent=1 // pred_check
      _
    $region39: #{tpu_custom_call.1} parent=1 // pred_check_branch
      %92 = sbr.rel (0) target = $region41
    $region40: #{tpu_custom_call.1} parent=1 // pred_region
      %93 = dma.done [#allocation9], 256
    $region41: #{tpu_custom_call.1} parent=1 // pred_fallthru
      _
    %v94 = vld [vmem:[#allocation2] sm:$0xff]
    %v95 = vld [vmem:[#allocation2 + $0x8] sm:$0xff]
    %v96 = vunpack.c.l.bf16 %v94
    %v97 = vunpack.c.h.bf16 %v94
    %v98 = vunpack.c.l.bf16 %v95
    %v99 = vunpack.c.h.bf16 %v95
    %v100 = vmul.f32 %v96, %v96
    %v101 = vmul.f32 %v97, %v97
    %v102 = vmul.f32 %v98, %v98
    %v103 = vmul.f32 %v99, %v99
    %v104 = vadd.f32 %v100, %v101
    %105 = vadd.xlane.f32.xlu0 %v104
    %v106 = vpop.xlane.xlu0 %105
    %v107 = vadd.f32 %v102, %v103
    %108 = vadd.xlane.f32.xlu0 %v107
    %v109 = vpop.xlane.xlu0 %108
    %v110 = vrcp.pop 256.0
    %v111 = vmul.f32 %v106, %v110
    %v112 = vmul.f32 %v109, %v110
    %v113 = vadd.f32 %v111, 1e-05
    %v114 = vadd.f32 %v112, 1e-05
    %v115 = vrsqrt.pop %v113
    %v116 = vrsqrt.pop %v114
    %v117 = vmul.f32 %v96, %v115
    %v118 = vmul.f32 %v97, %v115
    %v119 = vmul.f32 %v98, %v116
    %v120 = vmul.f32 %v99, %v116
    %v121 = vld [vmem:[#allocation5] sm:$0x3]
    %v123 = vlaneseq
    %v124 = vshrl.u32 %v123, 7
    %v125 = vsub.s32 0, %v124
    %v126 = vrot.slane %v121, %v125
    %v127 = vlaneseq
    %v128 = vshrl.u32 %v127, 7
    %v129 = vsub.s32 1, %v128
    %v130 = vrot.slane %v121, %v129
    %v133 = vmul.f32 %v117, %v126
    %v134 = vmul.f32 %v118, %v130
    %v135 = vmul.f32 %v119, %v126
    %v136 = vmul.f32 %v120, %v130
    %v137 = vpack.c.bf16 %v135, %v133
    %v138 = vpack.c.bf16 %v136, %v134
    %v139 = vld [vmem:[#allocation7] sm:$0xff]
    %v140 = vld [vmem:[#allocation7 + $0x8] sm:$0xff]
    %v141 = vld [vmem:[#allocation7 + $0x10] sm:$0xff]
    %v142 = vld [vmem:[#allocation7 + $0x18] sm:$0xff]
    %v143 = vld [vmem:[#allocation7 + $0x20] sm:$0xff]
    %v144 = vld [vmem:[#allocation7 + $0x28] sm:$0xff]
    %v145 = vld [vmem:[#allocation7 + $0x30] sm:$0xff]
    %v146 = vld [vmem:[#allocation7 + $0x38] sm:$0xff]
    %v147 = vld [vmem:[#allocation7 + $0x40] sm:$0xff]
    %v148 = vld [vmem:[#allocation7 + $0x48] sm:$0xff]
    %v149 = vld [vmem:[#allocation7 + $0x50] sm:$0xff]
    %v150 = vld [vmem:[#allocation7 + $0x58] sm:$0xff]
    %v151 = vld [vmem:[#allocation7 + $0x60] sm:$0xff]
    %v152 = vld [vmem:[#allocation7 + $0x68] sm:$0xff]
    %v153 = vld [vmem:[#allocation7 + $0x70] sm:$0xff]
    %v154 = vld [vmem:[#allocation7 + $0x78] sm:$0xff]
    %v155 = vld [vmem:[#allocation7 + $0x80] sm:$0xff]
    %v156 = vld [vmem:[#allocation7 + $0x88] sm:$0xff]
    %v157 = vld [vmem:[#allocation7 + $0x90] sm:$0xff]
    %v158 = vld [vmem:[#allocation7 + $0x98] sm:$0xff]
    %v159 = vld [vmem:[#allocation7 + $0xa0] sm:$0xff]
    %v160 = vld [vmem:[#allocation7 + $0xa8] sm:$0xff]
    %v161 = vld [vmem:[#allocation7 + $0xb0] sm:$0xff]
    %v162 = vld [vmem:[#allocation7 + $0xb8] sm:$0xff]
    %v163 = vld [vmem:[#allocation7 + $0xc0] sm:$0xff]
    %v164 = vld [vmem:[#allocation7 + $0xc8] sm:$0xff]
    %v165 = vld [vmem:[#allocation7 + $0xd0] sm:$0xff]
    %v166 = vld [vmem:[#allocation7 + $0xd8] sm:$0xff]
    %v167 = vld [vmem:[#allocation7 + $0xe0] sm:$0xff]
    %v168 = vld [vmem:[#allocation7 + $0xe8] sm:$0xff]
    %v169 = vld [vmem:[#allocation7 + $0xf0] sm:$0xff]
    %v170 = vld [vmem:[#allocation7 + $0xf8] sm:$0xff]
    %v171 = vld [vmem:[#allocation7 + $0x100] sm:$0xff]
    %v172 = vld [vmem:[#allocation7 + $0x108] sm:$0xff]
    %v173 = vld [vmem:[#allocation7 + $0x110] sm:$0xff]
    %v174 = vld [vmem:[#allocation7 + $0x118] sm:$0xff]
    %v175 = vld [vmem:[#allocation7 + $0x120] sm:$0xff]
    %v176 = vld [vmem:[#allocation7 + $0x128] sm:$0xff]
    %v177 = vld [vmem:[#allocation7 + $0x130] sm:$0xff]
    %v178 = vld [vmem:[#allocation7 + $0x138] sm:$0xff]
    %v179 = vld [vmem:[#allocation7 + $0x140] sm:$0xff]
    %v180 = vld [vmem:[#allocation7 + $0x148] sm:$0xff]
    %v181 = vld [vmem:[#allocation7 + $0x150] sm:$0xff]
    %v182 = vld [vmem:[#allocation7 + $0x158] sm:$0xff]
    %v183 = vld [vmem:[#allocation7 + $0x160] sm:$0xff]
    %v184 = vld [vmem:[#allocation7 + $0x168] sm:$0xff]
    %v185 = vld [vmem:[#allocation7 + $0x170] sm:$0xff]
    %v186 = vld [vmem:[#allocation7 + $0x178] sm:$0xff]
    %v187 = vld [vmem:[#allocation7 + $0x180] sm:$0xff]
    %v188 = vld [vmem:[#allocation7 + $0x188] sm:$0xff]
    %v189 = vld [vmem:[#allocation7 + $0x190] sm:$0xff]
    %v190 = vld [vmem:[#allocation7 + $0x198] sm:$0xff]
    %v191 = vld [vmem:[#allocation7 + $0x1a0] sm:$0xff]
    %v192 = vld [vmem:[#allocation7 + $0x1a8] sm:$0xff]
    %v193 = vld [vmem:[#allocation7 + $0x1b0] sm:$0xff]
    %v194 = vld [vmem:[#allocation7 + $0x1b8] sm:$0xff]
    %v195 = vld [vmem:[#allocation7 + $0x1c0] sm:$0xff]
    %v196 = vld [vmem:[#allocation7 + $0x1c8] sm:$0xff]
    %v197 = vld [vmem:[#allocation7 + $0x1d0] sm:$0xff]
    %v198 = vld [vmem:[#allocation7 + $0x1d8] sm:$0xff]
    %v199 = vld [vmem:[#allocation7 + $0x1e0] sm:$0xff]
    %v200 = vld [vmem:[#allocation7 + $0x1e8] sm:$0xff]
    %v201 = vld [vmem:[#allocation7 + $0x1f0] sm:$0xff]
    %v202 = vld [vmem:[#allocation7 + $0x1f8] sm:$0xff]
    %v267 = vunpack.c.l.b16 %v139
    %v268 = vunpack.c.h.b16 %v139
    %v269 = vunpack.c.l.b16 %v140
    %v270 = vunpack.c.h.b16 %v140
    %v271 = vunpack.c.l.b16 %v141
    %v272 = vunpack.c.h.b16 %v141
    %v273 = vunpack.c.l.b16 %v142
    %v274 = vunpack.c.h.b16 %v142
    %v275 = vunpack.c.l.b16 %v143
    %v276 = vunpack.c.h.b16 %v143
    %v277 = vunpack.c.l.b16 %v144
    %v278 = vunpack.c.h.b16 %v144
    %v279 = vunpack.c.l.b16 %v145
    %v280 = vunpack.c.h.b16 %v145
    %v281 = vunpack.c.l.b16 %v146
    %v282 = vunpack.c.h.b16 %v146
    %v283 = vunpack.c.l.b16 %v147
    %v284 = vunpack.c.h.b16 %v147
    %v285 = vunpack.c.l.b16 %v148
    %v286 = vunpack.c.h.b16 %v148
    %v287 = vunpack.c.l.b16 %v149
    %v288 = vunpack.c.h.b16 %v149
    %v289 = vunpack.c.l.b16 %v150
    %v290 = vunpack.c.h.b16 %v150
    %v291 = vunpack.c.l.b16 %v151
    %v292 = vunpack.c.h.b16 %v151
    %v293 = vunpack.c.l.b16 %v152
    %v294 = vunpack.c.h.b16 %v152
    %v295 = vunpack.c.l.b16 %v153
    %v296 = vunpack.c.h.b16 %v153
    %v297 = vunpack.c.l.b16 %v154
    %v298 = vunpack.c.h.b16 %v154
    %v299 = vunpack.c.l.b16 %v155
    %v300 = vunpack.c.h.b16 %v155
    %v301 = vunpack.c.l.b16 %v156
    %v302 = vunpack.c.h.b16 %v156
    %v303 = vunpack.c.l.b16 %v157
    %v304 = vunpack.c.h.b16 %v157
    %v305 = vunpack.c.l.b16 %v158
    %v306 = vunpack.c.h.b16 %v158
    %v307 = vunpack.c.l.b16 %v159
    %v308 = vunpack.c.h.b16 %v159
    %v309 = vunpack.c.l.b16 %v160
    %v310 = vunpack.c.h.b16 %v160
    %v311 = vunpack.c.l.b16 %v161
    %v312 = vunpack.c.h.b16 %v161
    %v313 = vunpack.c.l.b16 %v162
    %v314 = vunpack.c.h.b16 %v162
    %v315 = vunpack.c.l.b16 %v163
    %v316 = vunpack.c.h.b16 %v163
    %v317 = vunpack.c.l.b16 %v164
    %v318 = vunpack.c.h.b16 %v164
    %v319 = vunpack.c.l.b16 %v165
    %v320 = vunpack.c.h.b16 %v165
    %v321 = vunpack.c.l.b16 %v166
    %v322 = vunpack.c.h.b16 %v166
    %v323 = vunpack.c.l.b16 %v167
    %v324 = vunpack.c.h.b16 %v167
    %v325 = vunpack.c.l.b16 %v168
    %v326 = vunpack.c.h.b16 %v168
    %v327 = vunpack.c.l.b16 %v169
    %v328 = vunpack.c.h.b16 %v169
    %v329 = vunpack.c.l.b16 %v170
    %v330 = vunpack.c.h.b16 %v170
    %v331 = vunpack.c.l.b16 %v171
    %v332 = vunpack.c.h.b16 %v171
    %v333 = vunpack.c.l.b16 %v172
    %v334 = vunpack.c.h.b16 %v172
    %v335 = vunpack.c.l.b16 %v173
    %v336 = vunpack.c.h.b16 %v173
    %v337 = vunpack.c.l.b16 %v174
    %v338 = vunpack.c.h.b16 %v174
    %v339 = vunpack.c.l.b16 %v175
    %v340 = vunpack.c.h.b16 %v175
    %v341 = vunpack.c.l.b16 %v176
    %v342 = vunpack.c.h.b16 %v176
    %v343 = vunpack.c.l.b16 %v177
    %v344 = vunpack.c.h.b16 %v177
    %v345 = vunpack.c.l.b16 %v178
    %v346 = vunpack.c.h.b16 %v178
    %v347 = vunpack.c.l.b16 %v179
    %v348 = vunpack.c.h.b16 %v179
    %v349 = vunpack.c.l.b16 %v180
    %v350 = vunpack.c.h.b16 %v180
    %v351 = vunpack.c.l.b16 %v181
    %v352 = vunpack.c.h.b16 %v181
    %v353 = vunpack.c.l.b16 %v182
    %v354 = vunpack.c.h.b16 %v182
    %v355 = vunpack.c.l.b16 %v183
    %v356 = vunpack.c.h.b16 %v183
    %v357 = vunpack.c.l.b16 %v184
    %v358 = vunpack.c.h.b16 %v184
    %v359 = vunpack.c.l.b16 %v185
    %v360 = vunpack.c.h.b16 %v185
    %v361 = vunpack.c.l.b16 %v186
    %v362 = vunpack.c.h.b16 %v186
    %v363 = vunpack.c.l.b16 %v187
    %v364 = vunpack.c.h.b16 %v187
    %v365 = vunpack.c.l.b16 %v188
    %v366 = vunpack.c.h.b16 %v188
    %v367 = vunpack.c.l.b16 %v189
    %v368 = vunpack.c.h.b16 %v189
    %v369 = vunpack.c.l.b16 %v190
    %v370 = vunpack.c.h.b16 %v190
    %v371 = vunpack.c.l.b16 %v191
    %v372 = vunpack.c.h.b16 %v191
    %v373 = vunpack.c.l.b16 %v192
    %v374 = vunpack.c.h.b16 %v192
    %v375 = vunpack.c.l.b16 %v193
    %v376 = vunpack.c.h.b16 %v193
    %v377 = vunpack.c.l.b16 %v194
    %v378 = vunpack.c.h.b16 %v194
    %v379 = vunpack.c.l.b16 %v195
    %v380 = vunpack.c.h.b16 %v195
    %v381 = vunpack.c.l.b16 %v196
    %v382 = vunpack.c.h.b16 %v196
    %v383 = vunpack.c.l.b16 %v197
    %v384 = vunpack.c.h.b16 %v197
    %v385 = vunpack.c.l.b16 %v198
    %v386 = vunpack.c.h.b16 %v198
    %v387 = vunpack.c.l.b16 %v199
    %v388 = vunpack.c.h.b16 %v199
    %v389 = vunpack.c.l.b16 %v200
    %v390 = vunpack.c.h.b16 %v200
    %v391 = vunpack.c.l.b16 %v201
    %v392 = vunpack.c.h.b16 %v201
    %v393 = vunpack.c.l.b16 %v202
    %v394 = vunpack.c.h.b16 %v202
    %v395 = vpack.c.b16 %v271, %v267
    %v396 = vpack.c.b16 %v272, %v268
    %v397 = vpack.c.b16 %v273, %v269
    %v398 = vpack.c.b16 %v274, %v270
    %v399 = vpack.c.b16 %v279, %v275
    %v400 = vpack.c.b16 %v280, %v276
    %v401 = vpack.c.b16 %v281, %v277
    %v402 = vpack.c.b16 %v282, %v278
    %v403 = vpack.c.b16 %v287, %v283
    %v404 = vpack.c.b16 %v288, %v284
    %v405 = vpack.c.b16 %v289, %v285
    %v406 = vpack.c.b16 %v290, %v286
    %v407 = vpack.c.b16 %v295, %v291
    %v408 = vpack.c.b16 %v296, %v292
    %v409 = vpack.c.b16 %v297, %v293
    %v410 = vpack.c.b16 %v298, %v294
    %v411 = vpack.c.b16 %v303, %v299
    %v412 = vpack.c.b16 %v304, %v300
    %v413 = vpack.c.b16 %v305, %v301
    %v414 = vpack.c.b16 %v306, %v302
    %v415 = vpack.c.b16 %v311, %v307
    %v416 = vpack.c.b16 %v312, %v308
    %v417 = vpack.c.b16 %v313, %v309
    %v418 = vpack.c.b16 %v314, %v310
    %v419 = vpack.c.b16 %v319, %v315
    %v420 = vpack.c.b16 %v320, %v316
    %v421 = vpack.c.b16 %v321, %v317
    %v422 = vpack.c.b16 %v322, %v318
    %v423 = vpack.c.b16 %v327, %v323
    %v424 = vpack.c.b16 %v328, %v324
    %v425 = vpack.c.b16 %v329, %v325
    %v426 = vpack.c.b16 %v330, %v326
    %v427 = vpack.c.b16 %v335, %v331
    %v428 = vpack.c.b16 %v336, %v332
    %v429 = vpack.c.b16 %v337, %v333
    %v430 = vpack.c.b16 %v338, %v334
    %v431 = vpack.c.b16 %v343, %v339
    %v432 = vpack.c.b16 %v344, %v340
    %v433 = vpack.c.b16 %v345, %v341
    %v434 = vpack.c.b16 %v346, %v342
    %v435 = vpack.c.b16 %v351, %v347
    %v436 = vpack.c.b16 %v352, %v348
    %v437 = vpack.c.b16 %v353, %v349
    %v438 = vpack.c.b16 %v354, %v350
    %v439 = vpack.c.b16 %v359, %v355
    %v440 = vpack.c.b16 %v360, %v356
    %v441 = vpack.c.b16 %v361, %v357
    %v442 = vpack.c.b16 %v362, %v358
    %v443 = vpack.c.b16 %v367, %v363
    %v444 = vpack.c.b16 %v368, %v364
    %v445 = vpack.c.b16 %v369, %v365
    %v446 = vpack.c.b16 %v370, %v366
    %v447 = vpack.c.b16 %v375, %v371
    %v448 = vpack.c.b16 %v376, %v372
    %v449 = vpack.c.b16 %v377, %v373
    %v450 = vpack.c.b16 %v378, %v374
    %v451 = vpack.c.b16 %v383, %v379
    %v452 = vpack.c.b16 %v384, %v380
    %v453 = vpack.c.b16 %v385, %v381
    %v454 = vpack.c.b16 %v386, %v382
    %v455 = vpack.c.b16 %v391, %v387
    %v456 = vpack.c.b16 %v392, %v388
    %v457 = vpack.c.b16 %v393, %v389
    %v458 = vpack.c.b16 %v394, %v390
    %523 = vmatprep.subr.bf16.mxu0 %v424
    %524 = vmatpush1.bf16.msra.mxu0 %v423
    %525 = vmatprep.subr.bf16.mxu0 %v420
    %526 = vmatpush1.bf16.msra.mxu0 %v419
    %527 = vmatprep.subr.bf16.mxu0 %v416
    %528 = vmatpush1.bf16.msra.mxu0 %v415
    %529 = vmatprep.subr.bf16.mxu0 %v412
    %530 = vmatpush1.bf16.msra.mxu0 %v411
    %531 = vmatprep.subr.bf16.mxu0 %v408
    %532 = vmatpush1.bf16.msra.mxu0 %v407
    %533 = vmatprep.subr.bf16.mxu0 %v404
    %534 = vmatpush1.bf16.msra.mxu0 %v403
    %535 = vmatprep.subr.bf16.mxu0 %v400
    %536 = vmatpush1.bf16.msra.mxu0 %v399
    %537 = vmatprep.subr.bf16.mxu0 %v396
    %538 = vmatpush1.bf16.msra.mxu0 %v395
    %539 = vmatprep.subr.bf16.mxu0 %v456
    %540 = vmatpush2.bf16.msra.mxu0 %v455
    %541 = vmatprep.subr.bf16.mxu0 %v452
    %542 = vmatpush2.bf16.msra.mxu0 %v451
    %543 = vmatprep.subr.bf16.mxu0 %v448
    %544 = vmatpush2.bf16.msra.mxu0 %v447
    %545 = vmatprep.subr.bf16.mxu0 %v444
    %546 = vmatpush2.bf16.msra.mxu0 %v443
    %547 = vmatprep.subr.bf16.mxu0 %v440
    %548 = vmatpush2.bf16.msra.mxu0 %v439
    %549 = vmatprep.subr.bf16.mxu0 %v436
    %550 = vmatpush2.bf16.msra.mxu0 %v435
    %551 = vmatprep.subr.bf16.mxu0 %v432
    %552 = vmatpush2.bf16.msra.mxu0 %v431
    %553 = vmatprep.subr.bf16.mxu0 %v428
    %554 = vmatpush2.bf16.msra.mxu0 %v427
    %555 = vmatprep.mubr.bf16.mxu0 %v138
    %556 = vmatmul.mubr.bf16.gmra.mxu0 %v137
    %v557 = vpop.f32.mrf.mxu0
    %v558 = vadd.f32 0.0, %v557
    %v559 = vpop.f32.mrf.mxu0
    %v560 = vadd.f32 0.0, %v559
    %v561 = vpop.f32.mrf.mxu0
    %v562 = vadd.f32 0.0, %v561
    %v563 = vpop.f32.mrf.mxu0
    %v564 = vadd.f32 0.0, %v563
    %565 = vdwg.mxu0
    %566 = vmatprep.subr.bf16.mxu0 %v426
    %567 = vmatpush1.bf16.msra.mxu0 %v425
    %568 = vmatprep.subr.bf16.mxu0 %v422
    %569 = vmatpush1.bf16.msra.mxu0 %v421
    %570 = vmatprep.subr.bf16.mxu0 %v418
    %571 = vmatpush1.bf16.msra.mxu0 %v417
    %572 = vmatprep.subr.bf16.mxu0 %v414
    %573 = vmatpush1.bf16.msra.mxu0 %v413
    %574 = vmatprep.subr.bf16.mxu0 %v410
    %575 = vmatpush1.bf16.msra.mxu0 %v409
    %576 = vmatprep.subr.bf16.mxu0 %v406
    %577 = vmatpush1.bf16.msra.mxu0 %v405
    %578 = vmatprep.subr.bf16.mxu0 %v402
    %579 = vmatpush1.bf16.msra.mxu0 %v401
    %580 = vmatprep.subr.bf16.mxu0 %v398
    %581 = vmatpush1.bf16.msra.mxu0 %v397
    %582 = vmatprep.subr.bf16.mxu0 %v458
    %583 = vmatpush2.bf16.msra.mxu0 %v457
    %584 = vmatprep.subr.bf16.mxu0 %v454
    %585 = vmatpush2.bf16.msra.mxu0 %v453
    %586 = vmatprep.subr.bf16.mxu0 %v450
    %587 = vmatpush2.bf16.msra.mxu0 %v449
    %588 = vmatprep.subr.bf16.mxu0 %v446
    %589 = vmatpush2.bf16.msra.mxu0 %v445
    %590 = vmatprep.subr.bf16.mxu0 %v442
    %591 = vmatpush2.bf16.msra.mxu0 %v441
    %592 = vmatprep.subr.bf16.mxu0 %v438
    %593 = vmatpush2.bf16.msra.mxu0 %v437
    %594 = vmatprep.subr.bf16.mxu0 %v434
    %595 = vmatpush2.bf16.msra.mxu0 %v433
    %596 = vmatprep.subr.bf16.mxu0 %v430
    %597 = vmatpush2.bf16.msra.mxu0 %v429
    %598 = vmatprep.mubr.bf16.mxu0 %v138
    %599 = vmatmul.mubr.bf16.gmra.mxu0 %v137
    %v600 = vpop.f32.mrf.mxu0
    %v601 = vadd.f32 0.0, %v600
    %v602 = vpop.f32.mrf.mxu0
    %v603 = vadd.f32 0.0, %v602
    %v604 = vpop.f32.mrf.mxu0
    %v605 = vadd.f32 0.0, %v604
    %v606 = vpop.f32.mrf.mxu0
    %v607 = vadd.f32 0.0, %v606
    %608 = vdwg.mxu0
    %v609 = vld [vmem:[#allocation8] sm:$0xff]
    %v610 = vld [vmem:[#allocation8 + $0x8] sm:$0xff]
    %v611 = vld [vmem:[#allocation10] sm:$0xff]
    %v612 = vld [vmem:[#allocation10 + $0x8] sm:$0xff]
    %615 = vrot.lane.b32.xlu0 %v609, 64
    %v616 = vpop.permute.xlu0 %615
    %617 = vrot.lane.b32.xlu0 %v610, 64
    %v618 = vpop.permute.xlu0 %617
    %vm621 = vcmask 523264
    %v622 = vsel %vm621, %v609, %v616
    %v623 = vsel %vm621, %v610, %v618
    %626 = vrot.lane.b32.xlu0 %v611, 64
    %v627 = vpop.permute.xlu0 %626
    %628 = vrot.lane.b32.xlu0 %v612, 64
    %v629 = vpop.permute.xlu0 %628
    %v632 = vsel %vm621, %v611, %v627
    %v633 = vsel %vm621, %v612, %v629
    %v634 = vmul.f32 %v558, %v622
    %v635 = vmul.f32 %v560, %v622
    %v636 = vmul.f32 %v562, %v623
    %v637 = vmul.f32 %v564, %v623
    %638 = vrot.lane.b32.xlu0 %v558, 96
    %v639 = vpop.permute.xlu0 %638
    %640 = vrot.lane.b32.xlu0 %v562, 96
    %v641 = vpop.permute.xlu0 %640
    %642 = vrot.lane.b32.xlu0 %v560, 96
    %v643 = vpop.permute.xlu0 %642
    %644 = vrot.lane.b32.xlu0 %v564, 96
    %v645 = vpop.permute.xlu0 %644
    %v646 = vlaneseq
    %v647 = vand.u32 %v646, 127
    %vm648 = vcmp.lt.s32.totalorder %v647, 96
    %v649 = vsel %vm648, %v639, %v643
    %v650 = vsel %vm648, %v641, %v645
    %v651 = vsel %vm648, %v643, %v639
    %v652 = vsel %vm648, %v645, %v641
    %653 = vrot.lane.b32.xlu0 %v558, 32
    %v654 = vpop.permute.xlu0 %653
    %655 = vrot.lane.b32.xlu0 %v562, 32
    %v656 = vpop.permute.xlu0 %655
    %657 = vrot.lane.b32.xlu0 %v560, 32
    %v658 = vpop.permute.xlu0 %657
    %659 = vrot.lane.b32.xlu0 %v564, 32
    %v660 = vpop.permute.xlu0 %659
    %vm661 = vcmp.lt.s32.totalorder %v647, 32
    %v662 = vsel %vm661, %v654, %v658
    %v663 = vsel %vm661, %v656, %v660
    %v664 = vsel %vm661, %v658, %v654
    %v665 = vsel %vm661, %v660, %v656
    %v666 = vadd.s32 %v647, 128
    %vm667 = vcmp.lt.s32.totalorder %v647, 0
    %v668 = vsub.s32 0, %v647
    %v669 = vsel %vm667, %v668, %v647
    %v670 = vshrl.u32 %v669, 6
    %v671 = vand.u32 %v669, 63
    %v672 = vsub.s32 0, %v671
    %v673 = vsel %vm667, %v672, %v671
    %vm674 = vcmp.lt.s32.totalorder %v666, 0
    %v675 = vsub.s32 0, %v666
    %v676 = vsel %vm674, %v675, %v666
    %v677 = vshrl.u32 %v676, 6
    %v678 = vand.u32 %v676, 63
    %v679 = vsub.s32 0, %v678
    %v680 = vsel %vm674, %v679, %v678
    %vm681 = vcmp.ne.s32.totalorder %v673, 0
    %vm682 = vcmp.ne.s32.totalorder %v680, 0
    %vm683 = vcmp.lt.s32.totalorder %v673, 0
    %vm684 = vcmp.lt.s32.totalorder %v680, 0
    %vm685 = vmand %vm683, %vm681
    %vm686 = vmand %vm684, %vm682
    %v687 = vadd.s32 %v673, 64
    %v688 = vadd.s32 %v680, 64
    %v689 = vsel %vm685, %v687, %v673
    %v690 = vsel %vm686, %v688, %v680
    %vm691 = vcmp.lt.s32.totalorder %v689, 32
    %vm692 = vcmp.lt.s32.totalorder %v690, 32
    %v693 = vsub.f32 0.0, %v649
    %v694 = vsub.f32 0.0, %v651
    %v695 = vsub.f32 0.0, %v650
    %v696 = vsub.f32 0.0, %v652
    %v697 = vsel %vm691, %v693, %v664
    %v698 = vsel %vm692, %v694, %v662
    %v699 = vsel %vm691, %v695, %v665
    %v700 = vsel %vm692, %v696, %v663
    %v701 = vmul.f32 %v697, %v632
    %v702 = vmul.f32 %v698, %v632
    %v703 = vmul.f32 %v699, %v633
    %v704 = vmul.f32 %v700, %v633
    %v705 = vadd.f32 %v634, %v701
    %v706 = vadd.f32 %v635, %v702
    %v707 = vadd.f32 %v636, %v703
    %v708 = vadd.f32 %v637, %v704
    %v709 = vmul.f32 %v601, %v622
    %v710 = vmul.f32 %v605, %v623
    %711 = vrot.lane.b32.xlu0 %v601, 96
    %v712 = vpop.permute.xlu0 %711
    %713 = vrot.lane.b32.xlu0 %v605, 96
    %v714 = vpop.permute.xlu0 %713
    %715 = vrot.lane.b32.xlu0 %v601, 32
    %v716 = vpop.permute.xlu0 %715
    %717 = vrot.lane.b32.xlu0 %v605, 32
    %v718 = vpop.permute.xlu0 %717
    %v719 = vsub.f32 0.0, %v712
    %v720 = vsub.f32 0.0, %v714
    %v721 = vsel %vm691, %v719, %v716
    %v722 = vsel %vm691, %v720, %v718
    %v723 = vmul.f32 %v721, %v632
    %v724 = vmul.f32 %v722, %v633
    %v725 = vadd.f32 %v709, %v723
    %v726 = vadd.f32 %v710, %v724
    %727 = vst [vmem:[#allocation17] sm:$0xff] %v94
    %728 = vst [vmem:[#allocation17 + $0x8] sm:$0xff] %v95
    %v729 = vpack.c.bf16 %v707, %v705
    %v730 = vpack.c.bf16 %v708, %v706
    %v733 = vunpack.c.l.b16 %v729
    %v734 = vunpack.c.l.b16 %v730
    %v735 = vunpack.c.h.b16 %v729
    %v736 = vunpack.c.h.b16 %v730
    %v737 = vpack.c.b16 %v734, %v733
    %v738 = vpack.c.b16 %v736, %v735
    %741 = vst [vmem:[#allocation11] sm:$0xff] %v737
    %742 = vst [vmem:[#allocation11 + $0x8] sm:$0xff] %v738
    %v743 = vpack.c.bf16 %v726, %v725
    %v745 = vunpack.c.l.b16 %v743
    %v746 = vunpack.c.h.b16 %v743
    %v747 = vpack.c.b16 %v745, %v745
    %v748 = vpack.c.b16 %v746, %v746
    %751 = vst [vmem:[#allocation15] sm:$0xf] %v747
    %752 = vst [vmem:[#allocation15 + $0x8] sm:$0xf] %v748
    %v753 = vpack.c.bf16 %v607, %v603
    %v755 = vunpack.c.l.b16 %v753
    %v756 = vunpack.c.h.b16 %v753
    %v757 = vpack.c.b16 %v755, %v755
    %v758 = vpack.c.b16 %v756, %v756
    %761 = vst [vmem:[#allocation15 + $0x4] sm:$0xf] %v757
    %762 = vst [vmem:[#allocation15 + $0xc] sm:$0xf] %v758
    %vm763 = vcmask 519168
    %764 = vst.msk [vmem:[#allocation12] sm:$0xf] %vm763, %v747
    %765 = vst.msk [vmem:[#allocation12 + $0x4] sm:$0xf] %vm763, %v748
    %766 = vst.msk [vmem:[#allocation14] sm:$0xf] %vm763, %v757
    %767 = vst.msk [vmem:[#allocation14 + $0x4] sm:$0xf] %vm763, %v758
    %768 = vrot.lane.b32.xlu0 %v747, 64
    %v769 = vpop.permute.xlu0 %768
    %770 = vrot.lane.b32.xlu0 %v748, 64
    %v771 = vpop.permute.xlu0 %770
    %s774 = scalar_lea.vmem [#allocation12], 8
    %775 = vst.msk [vmem:[%s774] sm:$0xf] %vm763, %v769
    %776 = vst.msk [vmem:[%s774 + $0x4] sm:$0xf] %vm763, %v771
    %777 = vrot.lane.b32.xlu0 %v757, 64
    %v778 = vpop.permute.xlu0 %777
    %779 = vrot.lane.b32.xlu0 %v758, 64
    %v780 = vpop.permute.xlu0 %779
    %s783 = scalar_lea.vmem [#allocation14], 8
    %784 = vst.msk [vmem:[%s783] sm:$0xf] %vm763, %v778
    %785 = vst.msk [vmem:[%s783 + $0x4] sm:$0xf] %vm763, %v780
    // Predicated region
    $region42: #{tpu_custom_call.1} parent=1 // pred_check
      _
    $region43: #{tpu_custom_call.1} parent=1 // pred_check_branch
      %787 = sbr.rel (0) target = $region45
    $region44: #{tpu_custom_call.1} parent=1 // pred_region
      %s789 = ssub.s32 256, 256
      %790 = vsyncadd [#allocation4], %s789
      %s791 = sshll.u32 [#allocation11], 4
      %s792 = int_to_ptr.vmem [resolvable:$true] %s791
      %797 = dma.vmem_to_hbm [thread:$0]  %s792, 256, %s5, [#allocation4], 128, 128, 8
    $region45: #{tpu_custom_call.1} parent=1 // pred_fallthru
      _
    // Predicated region
    $region46: #{tpu_custom_call.1} parent=1 // pred_check
      _
    $region47: #{tpu_custom_call.1} parent=1 // pred_check_branch
      %799 = sbr.rel (0) target = $region49
    $region48: #{tpu_custom_call.1} parent=1 // pred_region
      %s801 = ssub.s32 256, 256
      %802 = vsyncadd [#allocation13], %s801
      %s803 = sshll.u32 [#allocation12], 4
      %s804 = int_to_ptr.vmem [resolvable:$true] %s803
      %809 = dma.vmem_to_hbm [thread:$0]  %s804, 256, %s6, [#allocation13], 64, 64, 4
    $region49: #{tpu_custom_call.1} parent=1 // pred_fallthru
      _
    // Predicated region
    $region50: #{tpu_custom_call.1} parent=1 // pred_check
      _
    $region51: #{tpu_custom_call.1} parent=1 // pred_check_branch
      %811 = sbr.rel (0) target = $region53
    $region52: #{tpu_custom_call.1} parent=1 // pred_region
      %s813 = ssub.s32 256, 256
      %814 = vsyncadd [#allocation13], %s813
      %s815 = sshll.u32 [#allocation14], 4
      %s816 = int_to_ptr.vmem [resolvable:$true] %s815
      %821 = dma.vmem_to_hbm [thread:$0]  %s816, 256, %s7, [#allocation13], 64, 64, 4
    $region53: #{tpu_custom_call.1} parent=1 // pred_fallthru
      _
    // Predicated region
    $region54: #{tpu_custom_call.1} parent=1 // pred_check
      _
    $region55: #{tpu_custom_call.1} parent=1 // pred_check_branch
      %823 = sbr.rel (0) target = $region57
    $region56: #{tpu_custom_call.1} parent=1 // pred_region
      %s825 = ssub.s32 256, 256
      %826 = vsyncadd [#allocation16], %s825
      %s827 = sshll.u32 [#allocation15], 4
      %s828 = int_to_ptr.vmem [resolvable:$true] %s827
      %833 = dma.vmem_to_hbm [thread:$0]  %s828, 256, %s8, [#allocation16], 128, 128, 8
    $region57: #{tpu_custom_call.1} parent=1 // pred_fallthru
      _
    // Predicated region
    $region58: #{tpu_custom_call.1} parent=1 // pred_check
      _
    $region59: #{tpu_custom_call.1} parent=1 // pred_check_branch
      %835 = sbr.rel (0) target = $region61
    $region60: #{tpu_custom_call.1} parent=1 // pred_region
      %s837 = ssub.s32 256, 256
      %838 = vsyncadd [#allocation16], %s837
      %s839 = sshll.u32 [#allocation17], 4
      %s840 = int_to_ptr.vmem [resolvable:$true] %s839
      %845 = dma.vmem_to_hbm [thread:$0]  %s840, 256, %s9, [#allocation16], 128, 128, 8
    $region61: #{tpu_custom_call.1} parent=1 // pred_fallthru
      _
    // Predicated region
    $region62: #{tpu_custom_call.1} parent=1 // pred_check
      _
    $region63: #{tpu_custom_call.1} parent=1 // pred_check_branch
      %847 = sbr.rel (0) target = $region65
    $region64: #{tpu_custom_call.1} parent=1 // pred_region
      %848 = dma.done [#allocation4], 256
    $region65: #{tpu_custom_call.1} parent=1 // pred_fallthru
      _
    // Predicated region
    $region66: #{tpu_custom_call.1} parent=1 // pred_check
      _
    $region67: #{tpu_custom_call.1} parent=1 // pred_check_branch
      %850 = sbr.rel (0) target = $region69
    $region68: #{tpu_custom_call.1} parent=1 // pred_region
      %851 = dma.done [#allocation13], 256
    $region69: #{tpu_custom_call.1} parent=1 // pred_fallthru
      _
    // Predicated region
    $region70: #{tpu_custom_call.1} parent=1 // pred_check
      _
    $region71: #{tpu_custom_call.1} parent=1 // pred_check_branch
      %853 = sbr.rel (0) target = $region73
    $region72: #{tpu_custom_call.1} parent=1 // pred_region
      %854 = dma.done [#allocation13], 256
    $region73: #{tpu_custom_call.1} parent=1 // pred_fallthru
      _
    // Predicated region
    $region74: #{tpu_custom_call.1} parent=1 // pred_check
      _
    $region75: #{tpu_custom_call.1} parent=1 // pred_check_branch
      %856 = sbr.rel (0) target = $region77
    $region76: #{tpu_custom_call.1} parent=1 // pred_region
      %857 = dma.done [#allocation16], 256
    $region77: #{tpu_custom_call.1} parent=1 // pred_fallthru
      _
    // Predicated region
    $region78: #{tpu_custom_call.1} parent=1 // pred_check
      _
    $region79: #{tpu_custom_call.1} parent=1 // pred_check_branch
      %859 = sbr.rel (0) target = $region81
    $region80: #{tpu_custom_call.1} parent=1 // pred_region
      %860 = dma.done [#allocation16], 256
    $region81: #{tpu_custom_call.1} parent=1 // pred_fallthru
      _
    %861 = vsyncpa [#allocation3], 1
    %862 = vsyncpa [#allocation6], 1
    %863 = vsyncpa [#allocation9], 1
    %864 = vsyncpa [#allocation4], 1
    %865 = vsyncpa [#allocation13], 1
    %866 = vsyncpa [#allocation16], 1

</llo_original>
